<compile_context>
chip_gen: v6e
topology: v6e:2x2x1
jax: 0.10.0
libtpu: 0.0.40
codegen_flags: <defaults>
</compile_context>

<pallas_src>
import functools

import jax
import jax.numpy as jnp
from jax.experimental import pallas as pl
from jax.experimental.pallas import tpu as pltpu

LANE = 128


def _round_up(x, m):
    return ((x + m - 1) // m) * m


def _pick_batch_tile(B):
    # Largest tile that divides B, is a multiple of 8 (f32 sublanes), and keeps
    # the live [TB, 4*hp] gate block modest so vregs don't spill.
    for tb in (512, 256, 128, 64, 32, 16, 8):
        if B % tb == 0:
            return tb
    return B  # tiny / ragged batch: single whole-batch block (full extent is legal)


def pad_lanes(a, width):
    """Zero-pad the last dim of a 2-D activation up to `width` (lane-dense layout)."""
    return jnp.pad(a, ((0, 0), (0, width - a.shape[1])))


def prepare_params(w_gates, b_gates, w_out, b_out, n_input, n_hidden,
                   mxu_dtype=jnp.bfloat16):
    """One-time parameter layout.  Call once; reuse the result for every step.

    w_gates: [n_hidden + n_input, 4*n_hidden]; rows ordered [h; x] (matching
             torch.cat([h, x], dim=1)), columns blocked forget|input|cell|output.
    Returns (w_hx, b_g, w_o, b_o) in padded, MXU-ready layout.
    """
    hp = _round_up(n_hidden, LANE)
    nip = _round_up(n_input, LANE)
    f32 = jnp.float32

    def pad_gate_cols(w):
        rows = w.shape[0]
        w4 = w.reshape(rows, 4, n_hidden)
        w4 = jnp.pad(w4, ((0, 0), (0, 0), (0, hp - n_hidden)))
        return w4.reshape(rows, 4 * hp)

    w_h = pad_gate_cols(w_gates[:n_hidden].astype(f32))    # [H , 4*hp]
    w_x = pad_gate_cols(w_gates[n_hidden:].astype(f32))    # [Ni, 4*hp]
    # Stack into one [hp + nip, 4*hp] operand.  Padded rows are zero, so padded
    # lanes of h / x can never leak into valid gate columns.
    w_hx = jnp.zeros((hp + nip, 4 * hp), f32)
    w_hx = w_hx.at[:n_hidden, :].set(w_h)
    w_hx = w_hx.at[hp:hp + n_input, :].set(w_x)
    w_hx = w_hx.astype(mxu_dtype)

    b_g = pad_gate_cols(b_gates.astype(f32))                                # [1, 4*hp]
    w_o = jnp.pad(w_out, ((0, hp - n_hidden), (0, hp - n_hidden))).astype(mxu_dtype)
    b_o = jnp.pad(b_out, ((0, 0), (0, hp - n_hidden))).astype(f32)          # [1, hp]
    return w_hx, b_g, w_o, b_o


def lstm_cell_kernel(h_ref, x_ref, c_ref, w_ref, bg_ref, wo_ref, bo_ref,
                     out_ref, h_new_ref, c_new_ref, *, hp, n_hidden):
    mm = w_ref.dtype  # MXU operand dtype (bf16 by default); accumulation is f32.

    # Single MXU pass: [h | x] @ W_hx + b  -> [TB, 4*hp]
    hx = jnp.concatenate([h_ref[...].astype(mm), x_ref[...].astype(mm)], axis=1)
    z = jnp.dot(hx, w_ref[...], preferred_element_type=jnp.float32) + bg_ref[...]

    # One sigmoid over the whole lane-dense block, then 128-lane-aligned slices.
    s = jax.nn.sigmoid(z)
    f_gate = s[:, 0 * hp:1 * hp]
    i_gate = s[:, 1 * hp:2 * hp]
    g_gate = s[:, 2 * hp:3 * hp]   # sigmoid cell candidate, exactly as in the module
    o_gate = s[:, 3 * hp:4 * hp]

    c_new = c_ref[...] * f_gate + i_gate * g_gate
    h_new = o_gate * jnp.tanh(c_new)

    if hp != n_hidden:
        # Keep padded lanes of the persistent state exactly zero so the padded
        # [B, hp] h/c layout is stable across recurrent steps.
        valid = jax.lax.broadcasted_iota(jnp.int32, (1, hp), 1) < n_hidden
        c_new = jnp.where(valid, c_new, 0.0)
        h_new = jnp.where(valid, h_new, 0.0)

    # Output projection + relu (padded rows/cols of W_out are zero -> no leak).
    out = jnp.dot(h_new.astype(mm), wo_ref[...],
                  preferred_element_type=jnp.float32) + bo_ref[...]
    out_ref[...] = jnp.maximum(out, 0.0)
    h_new_ref[...] = h_new
    c_new_ref[...] = c_new


@functools.partial(jax.jit, static_argnames=("n_hidden",))
def lstm_cell_step(x_p, h_p, c_p, w_hx, b_g, w_o, b_o, *, n_hidden):
    """One LSTMCell step on padded activations.

    x_p: [B, nip], h_p / c_p: [B, hp]   (lane-dense padded; see pad_lanes).
    Returns (out_p, h_new_p, c_new_p), all [B, hp] padded (valid cols 0:n_hidden).
    """
    B, hp = h_p.shape
    nip = x_p.shape[1]
    TB = _pick_batch_tile(B)
    grid = (B // TB,)

    # VMEM budget: resident weights + double-buffered activation tiles + temps.
    wbytes = (w_hx.size * w_hx.dtype.itemsize + w_o.size * w_o.dtype.itemsize
              + (b_g.size + b_o.size) * 4)
    act_in = TB * (2 * hp + nip) * 4
    act_out = 3 * TB * hp * 4
    temps = TB * (8 * hp + hp + nip) * 4          # z, s, hx, h_new/c_new live values
    vmem_limit = 2 * wbytes + 2 * (act_in + act_out) + 2 * temps + (4 << 20)
    vmem_limit = int(min(max(vmem_limit, 16 << 20), 64 << 20))

    def row_spec(bs):
        return pl.BlockSpec(bs, lambda i: (i, 0))

    def const_spec(bs):
        return pl.BlockSpec(bs, lambda i: (0, 0))

    out_p, h_new_p, c_new_p = pl.pallas_call(
        functools.partial(lstm_cell_kernel, hp=hp, n_hidden=n_hidden),
        grid=grid,
        in_specs=[
            row_spec((TB, hp)),                     # h   (tiled over batch)
            row_spec((TB, nip)),                    # x
            row_spec((TB, hp)),                     # c
            const_spec((hp + nip, 4 * hp)),         # W_hx (resident across grid)
            const_spec((1, 4 * hp)),                # b_gates
            const_spec((hp, hp)),                   # W_out
            const_spec((1, hp)),                    # b_out
        ],
        out_specs=(
            row_spec((TB, hp)),                     # out
            row_spec((TB, hp)),                     # h_new
            row_spec((TB, hp)),                     # c_new
        ),
        out_shape=(
            jax.ShapeDtypeStruct((B, hp), jnp.float32),
            jax.ShapeDtypeStruct((B, hp), jnp.float32),
            jax.ShapeDtypeStruct((B, hp), jnp.float32),
        ),
        input_output_aliases={0: 1, 2: 2},          # h -> h_new, c -> c_new in place
        compiler_params=pltpu.CompilerParams(
            dimension_semantics=("parallel",),
            vmem_limit_bytes=vmem_limit),
    )(h_p, x_p, c_p, w_hx, b_g, w_o, b_o)
    return out_p, h_new_p, c_new_p


def reference(x, h, c, w_gates, b_gates, w_out, b_out):
    """Plain-JAX reference mirroring the PyTorch forward."""
    n_hidden = h.shape[1]
    hx = jnp.concatenate([h, x], axis=1)
    z = hx @ w_gates + b_gates
    f = jax.nn.sigmoid(z[:, 0 * n_hidden:1 * n_hidden])
    i = jax.nn.sigmoid(z[:, 1 * n_hidden:2 * n_hidden])
    g = jax.nn.sigmoid(z[:, 2 * n_hidden:3 * n_hidden])   # sigmoid, per the module
    o = jax.nn.sigmoid(z[:, 3 * n_hidden:4 * n_hidden])
    c_new = c * f + i * g
    h_new = o * jnp.tanh(c_new)
    out = jnp.maximum(h_new @ w_out + b_out, 0.0)
    return out, (h_new, c_new)


if __name__ == "__main__":
    B, n_input, n_hidden = 8, 16, 32
    D = n_input + n_hidden

    key = jax.random.PRNGKey(0)
    kx, kh, kc, kwg, kbg, kwo, kbo = jax.random.split(key, 7)

    x = jax.random.normal(kx, (B, n_input), dtype=jnp.float32)
    h = jax.random.normal(kh, (B, n_hidden), dtype=jnp.float32)
    c = jax.random.normal(kc, (B, n_hidden), dtype=jnp.float32)

    # Parameters (shapes from 4x nn.Linear(n_input+n_hidden, n_hidden) +
    # nn.Linear(n_hidden, n_hidden)); stored pre-transposed for x @ W, columns
    # blocked forget|input|cell|output, rows ordered [h; x].
    scale = 1.0 / jnp.sqrt(jnp.float32(D))
    w_gates = jax.random.uniform(kwg, (D, 4 * n_hidden), jnp.float32, -scale, scale)
    b_gates = jax.random.uniform(kbg, (1, 4 * n_hidden), jnp.float32, -scale, scale)
    scale_o = 1.0 / jnp.sqrt(jnp.float32(n_hidden))
    w_out = jax.random.uniform(kwo, (n_hidden, n_hidden), jnp.float32, -scale_o, scale_o)
    b_out = jax.random.uniform(kbo, (1, n_hidden), jnp.float32, -scale_o, scale_o)

    out_ref, (h_ref_, c_ref_) = reference(x, h, c, w_gates, b_gates, w_out, b_out)

    hp = _round_up(n_hidden, LANE)
    nip = _round_up(n_input, LANE)
    # Persistent padded activations: done once at the loop boundary, not per step.
    x_p = pad_lanes(x, nip)
    h_p = pad_lanes(h, hp)
    c_p = pad_lanes(c, hp)

    # --- f32 MXU path: must match the reference tightly ---------------------
    params_f32 = prepare_params(w_gates, b_gates, w_out, b_out,
                                n_input, n_hidden, mxu_dtype=jnp.float32)
    out_p, h_new_p, c_new_p = lstm_cell_step(x_p, h_p, c_p, *params_f32,
                                             n_hidden=n_hidden)
    jax.block_until_ready((out_p, h_new_p, c_new_p))
    assert jnp.allclose(out_p[:, :n_hidden], out_ref, atol=1e-5, rtol=1e-5)
    assert jnp.allclose(h_new_p[:, :n_hidden], h_ref_, atol=1e-5, rtol=1e-5)
    assert jnp.allclose(c_new_p[:, :n_hidden], c_ref_, atol=1e-5, rtol=1e-5)
    # Padded lanes stay exactly zero -> padded h/c layout is stable across steps.
    assert jnp.all(h_new_p[:, n_hidden:] == 0.0)
    assert jnp.all(c_new_p[:, n_hidden:] == 0.0)

    # --- default bf16-to-MXU path (perf path): looser tolerance --------------
    params_bf16 = prepare_params(w_gates, b_gates, w_out, b_out, n_input, n_hidden)
    out_b, h_b, c_b = lstm_cell_step(x_p, h_p, c_p, *params_bf16, n_hidden=n_hidden)
    jax.block_until_ready((out_b, h_b, c_b))
    assert jnp.allclose(out_b[:, :n_hidden], out_ref, atol=5e-2, rtol=5e-2)
    assert jnp.allclose(h_b[:, :n_hidden], h_ref_, atol=5e-2, rtol=5e-2)
    assert jnp.allclose(c_b[:, :n_hidden], c_ref_, atol=5e-2, rtol=5e-2)

    # Chain a second step on the padded state (demonstrates the persistent
    # padded layout + in-place h/c update; no re-pad / re-slice between steps).
    out2, h2, c2 = lstm_cell_step(x_p, h_b, c_b, *params_bf16, n_hidden=n_hidden)
    jax.block_until_ready((out2, h2, c2))

    # TODO(synk): if this cell is ever driven by a time loop, fuse the scan into
    # the kernel (grid over T, weights resident, h/c in VMEM scratch).
    print("KERNEL_OK")
</pallas_src>

<mosaic_0001>
module attributes {stable_mosaic.version = 11 : i64} {
  func.func @lstm_cell_kernel(%arg0: i32, %arg1: memref<8x128xf32, #tpu.memory_space<vmem>>, %arg2: memref<8x128xf32, #tpu.memory_space<vmem>>, %arg3: memref<8x128xf32, #tpu.memory_space<vmem>>, %arg4: memref<256x512xf32, #tpu.memory_space<vmem>>, %arg5: memref<1x512xf32, #tpu.memory_space<vmem>>, %arg6: memref<128x128xf32, #tpu.memory_space<vmem>>, %arg7: memref<1x128xf32, #tpu.memory_space<vmem>>, %arg8: memref<8x128xf32, #tpu.memory_space<vmem>>, %arg9: memref<8x128xf32, #tpu.memory_space<vmem>>, %arg10: memref<8x128xf32, #tpu.memory_space<vmem>>) attributes {dimension_semantics = [#tpu.dimension_semantics<parallel>], iteration_bounds = array<i64: 1>, scalar_prefetch = 0 : i64, scratch_operands = 0 : i64, tpu.core_type = #tpu.core_type<tc>, window_params = [{transform_indices = @transform_0, window_bounds = array<i64: 8, 128>}, {transform_indices = @transform_1, window_bounds = array<i64: 8, 128>}, {transform_indices = @transform_2, window_bounds = array<i64: 8, 128>}, {pipeline_mode = #tpu.pipeline_mode<synchronous>, transform_indices = @transform_3, window_bounds = array<i64: 256, 512>}, {pipeline_mode = #tpu.pipeline_mode<synchronous>, transform_indices = @transform_4, window_bounds = array<i64: 1, 512>}, {pipeline_mode = #tpu.pipeline_mode<synchronous>, transform_indices = @transform_5, window_bounds = array<i64: 128, 128>}, {pipeline_mode = #tpu.pipeline_mode<synchronous>, transform_indices = @transform_6, window_bounds = array<i64: 1, 128>}, {transform_indices = @transform_7, window_bounds = array<i64: 8, 128>}, {transform_indices = @transform_8, window_bounds = array<i64: 8, 128>}, {transform_indices = @transform_9, window_bounds = array<i64: 8, 128>}]} {
    %c0 = arith.constant 0 : index
    %c0_0 = arith.constant 0 : index
    %0 = vector.load %arg1[%c0, %c0_0] : memref<8x128xf32, #tpu.memory_space<vmem>>, vector<8x128xf32>
    %c0_1 = arith.constant 0 : index
    %c0_2 = arith.constant 0 : index
    %1 = vector.load %arg2[%c0_1, %c0_2] : memref<8x128xf32, #tpu.memory_space<vmem>>, vector<8x128xf32>
    %2 = tpu.concatenate %0, %1 in 1 : vector<8x128xf32>, vector<8x128xf32> -> vector<8x256xf32>
    %c0_3 = arith.constant 0 : index
    %c0_4 = arith.constant 0 : index
    %3 = vector.load %arg4[%c0_3, %c0_4] : memref<256x512xf32, #tpu.memory_space<vmem>>, vector<256x512xf32>
    %cst = arith.constant dense<0.000000e+00> : vector<8x512xf32>
    %4 = tpu.matmul %2, %3, %cst {dimension_numbers = #tpu.dot_dimension_numbers<[1], [0], [0], [1], [0, 0, 1, 1], [], []>} : vector<8x256xf32>, vector<256x512xf32>, vector<8x512xf32> -> vector<8x512xf32>
    %c0_5 = arith.constant 0 : index
    %c0_6 = arith.constant 0 : index
    %5 = vector.load %arg5[%c0_5, %c0_6] : memref<1x512xf32, #tpu.memory_space<vmem>>, vector<1x512xf32>
    %6 = vector.broadcast %5 : vector<1x512xf32> to vector<8x512xf32>
    %7 = arith.addf %4, %6 : vector<8x512xf32>
    %8 = arith.negf %7 : vector<8x512xf32>
    %9 = math.exp %8 : vector<8x512xf32>
    %cst_7 = arith.constant 1.000000e+00 : f32
    %10 = vector.broadcast %cst_7 : f32 to vector<8x512xf32>
    %11 = arith.addf %10, %9 : vector<8x512xf32>
    %12 = arith.divf %10, %11 : vector<8x512xf32>
    %13 = vector.extract_strided_slice %12 {offsets = [0, 0], sizes = [8, 128], strides = [1, 1]} : vector<8x512xf32> to vector<8x128xf32>
    %14 = vector.extract_strided_slice %12 {offsets = [0, 128], sizes = [8, 128], strides = [1, 1]} : vector<8x512xf32> to vector<8x128xf32>
    %15 = vector.extract_strided_slice %12 {offsets = [0, 256], sizes = [8, 128], strides = [1, 1]} : vector<8x512xf32> to vector<8x128xf32>
    %16 = vector.extract_strided_slice %12 {offsets = [0, 384], sizes = [8, 128], strides = [1, 1]} : vector<8x512xf32> to vector<8x128xf32>
    %c0_8 = arith.constant 0 : index
    %c0_9 = arith.constant 0 : index
    %17 = vector.load %arg3[%c0_8, %c0_9] : memref<8x128xf32, #tpu.memory_space<vmem>>, vector<8x128xf32>
    %18 = arith.mulf %17, %13 : vector<8x128xf32>
    %19 = arith.mulf %14, %15 : vector<8x128xf32>
    %20 = arith.addf %18, %19 : vector<8x128xf32>
    %21 = math.tanh %20 : vector<8x128xf32>
    %22 = arith.mulf %16, %21 : vector<8x128xf32>
    %23 = tpu.iota {dimensions = array<i32: 1>} : vector<1x128xi32>
    %c32_i32 = arith.constant 32 : i32
    %24 = vector.broadcast %c32_i32 : i32 to vector<1x128xi32>
    %25 = arith.cmpi slt, %23, %24 : vector<1x128xi32>
    %cst_10 = arith.constant 0.000000e+00 : f32
    %26 = vector.shape_cast %25 : vector<1x128xi1> to vector<1x128xi1>
    %27 = vector.broadcast %26 : vector<1x128xi1> to vector<8x128xi1>
    %28 = vector.broadcast %cst_10 : f32 to vector<8x128xf32>
    %29 = arith.select %27, %20, %28 : vector<8x128xi1>, vector<8x128xf32>
    %cst_11 = arith.constant 0.000000e+00 : f32
    %30 = vector.shape_cast %25 : vector<1x128xi1> to vector<1x128xi1>
    %31 = vector.broadcast %30 : vector<1x128xi1> to vector<8x128xi1>
    %32 = vector.broadcast %cst_11 : f32 to vector<8x128xf32>
    %33 = arith.select %31, %22, %32 : vector<8x128xi1>, vector<8x128xf32>
    %c0_12 = arith.constant 0 : index
    %c0_13 = arith.constant 0 : index
    %34 = vector.load %arg6[%c0_12, %c0_13] : memref<128x128xf32, #tpu.memory_space<vmem>>, vector<128x128xf32>
    %cst_14 = arith.constant dense<0.000000e+00> : vector<8x128xf32>
    %35 = tpu.matmul %33, %34, %cst_14 {dimension_numbers = #tpu.dot_dimension_numbers<[1], [0], [0], [1], [0, 0, 1, 1], [], []>} : vector<8x128xf32>, vector<128x128xf32>, vector<8x128xf32> -> vector<8x128xf32>
    %c0_15 = arith.constant 0 : index
    %c0_16 = arith.constant 0 : index
    %36 = vector.load %arg7[%c0_15, %c0_16] : memref<1x128xf32, #tpu.memory_space<vmem>>, vector<1x128xf32>
    %37 = vector.broadcast %36 : vector<1x128xf32> to vector<8x128xf32>
    %38 = arith.addf %35, %37 : vector<8x128xf32>
    %cst_17 = arith.constant 0.000000e+00 : f32
    %39 = vector.broadcast %cst_17 : f32 to vector<8x128xf32>
    %40 = arith.maximumf %38, %39 : vector<8x128xf32>
    %c0_18 = arith.constant 0 : index
    %c0_19 = arith.constant 0 : index
    %41 = vector.load %arg8[%c0_18, %c0_19] : memref<8x128xf32, #tpu.memory_space<vmem>>, vector<8x128xf32>
    tpu.vector_store %arg8[%c0_18, %c0_19], %40 {strides = array<i32>} : memref<8x128xf32, #tpu.memory_space<vmem>>, vector<8x128xf32>,
    %c0_20 = arith.constant 0 : index
    %c0_21 = arith.constant 0 : index
    %42 = vector.load %arg9[%c0_20, %c0_21] : memref<8x128xf32, #tpu.memory_space<vmem>>, vector<8x128xf32>
    tpu.vector_store %arg9[%c0_20, %c0_21], %33 {strides = array<i32>} : memref<8x128xf32, #tpu.memory_space<vmem>>, vector<8x128xf32>,
    %c0_22 = arith.constant 0 : index
    %c0_23 = arith.constant 0 : index
    %43 = vector.load %arg10[%c0_22, %c0_23] : memref<8x128xf32, #tpu.memory_space<vmem>>, vector<8x128xf32>
    tpu.vector_store %arg10[%c0_22, %c0_23], %29 {strides = array<i32>} : memref<8x128xf32, #tpu.memory_space<vmem>>, vector<8x128xf32>,
    return
  }
  func.func @transform_0(%arg0: i32) -> (i32, i32) {
    %c0_i32 = arith.constant 0 : i32
    %c0_i32_0 = arith.constant 0 : i32
    return %arg0, %c0_i32 : i32, i32
  }
  func.func @transform_1(%arg0: i32) -> (i32, i32) {
    %c0_i32 = arith.constant 0 : i32
    %c0_i32_0 = arith.constant 0 : i32
    return %arg0, %c0_i32 : i32, i32
  }
  func.func @transform_2(%arg0: i32) -> (i32, i32) {
    %c0_i32 = arith.constant 0 : i32
    %c0_i32_0 = arith.constant 0 : i32
    return %arg0, %c0_i32 : i32, i32
  }
  func.func @transform_3(%arg0: i32) -> (i32, i32) {
    %c0_i32 = arith.constant 0 : i32
    %c0_i32_0 = arith.constant 0 : i32
    %c0_i32_1 = arith.constant 0 : i32
    return %c0_i32, %c0_i32_0 : i32, i32
  }
  func.func @transform_4(%arg0: i32) -> (i32, i32) {
    %c0_i32 = arith.constant 0 : i32
    %c0_i32_0 = arith.constant 0 : i32
    %c0_i32_1 = arith.constant 0 : i32
    return %c0_i32, %c0_i32_0 : i32, i32
  }
  func.func @transform_5(%arg0: i32) -> (i32, i32) {
    %c0_i32 = arith.constant 0 : i32
    %c0_i32_0 = arith.constant 0 : i32
    %c0_i32_1 = arith.constant 0 : i32
    return %c0_i32, %c0_i32_0 : i32, i32
  }
  func.func @transform_6(%arg0: i32) -> (i32, i32) {
    %c0_i32 = arith.constant 0 : i32
    %c0_i32_0 = arith.constant 0 : i32
    %c0_i32_1 = arith.constant 0 : i32
    return %c0_i32, %c0_i32_0 : i32, i32
  }
  func.func @transform_7(%arg0: i32) -> (i32, i32) {
    %c0_i32 = arith.constant 0 : i32
    %c0_i32_0 = arith.constant 0 : i32
    return %arg0, %c0_i32 : i32, i32
  }
  func.func @transform_8(%arg0: i32) -> (i32, i32) {
    %c0_i32 = arith.constant 0 : i32
    %c0_i32_0 = arith.constant 0 : i32
    return %arg0, %c0_i32 : i32, i32
  }
  func.func @transform_9(%arg0: i32) -> (i32, i32) {
    %c0_i32 = arith.constant 0 : i32
    %c0_i32_0 = arith.constant 0 : i32
    return %arg0, %c0_i32 : i32, i32
  }
}

</mosaic_0001>

<llo_original>
// kernel: lstm_cell_step.1
$region0: #{lstm_cell_step.1}
  #allocation0 [shape = 'u32[]', space=smem, size = 0x4, offset = 0x4, fixed_abs, tag = 'smem constant byte address 0x4 - core index']
  #allocation1 [shape = 'u32[144,128]{1,0:T(1,128)}', space=vmem, size = 0x12000, scoped, tag = 'internal scratch']
  %s0 = inlined_call_operand.hbm [shape: f32[8,128], index: 0, kind: input, shape index: {}, may-alias: {0,8}]
  %s1 = inlined_call_operand.vmem [shape: f32[8,128], index: 1, kind: input, shape index: {}]
  %s2 = inlined_call_operand.hbm [shape: f32[8,128], index: 2, kind: input, shape index: {}, may-alias: {2,9}]
  %s3 = inlined_call_operand.hbm [shape: f32[256,512], index: 3, kind: input, shape index: {}]
  %s4 = inlined_call_operand.vmem [shape: f32[1,512], index: 4, kind: input, shape index: {}]
  %s5 = inlined_call_operand.hbm [shape: f32[128,128], index: 5, kind: input, shape index: {}]
  %s6 = inlined_call_operand.vmem [shape: f32[1,128], index: 6, kind: input, shape index: {}]
  %s7 = inlined_call_operand.hbm [shape: f32[8,128], index: 7, kind: output, shape index: {0}]
  %s8 = inlined_call_operand.hbm [shape: f32[8,128], index: 8, kind: output, shape index: {1}, may-alias: {0,8}]
  %s9 = inlined_call_operand.hbm [shape: f32[8,128], index: 9, kind: output, shape index: {2}, may-alias: {2,9}]
  %10 = xla_tuple %s7, %s8, %s9
  %s11 = sld [smem:[#allocation0]]
  $region70: #{lstm_cell_step.1} parent=0
    _
  %s13 = ssub.s32 1, %s11
  %s14 = scalar_select 0, %s13, %s11
  $region1: #{lstm_cell_step.1} parent=0
    #allocation2 [shape = 'u8[4096]{0}', space=vmem, size = 0x1000, scoped, tag = 'input window, operand 0, single buffered']
    #allocation3 [shape = 's32[1]{0}', space=sflag, size = 0x4, scoped, tag = 'scoped memory for lstm_cell_step.1']
    #allocation4 [shape = 's32[1]{0}', space=sflag, size = 0x4, scoped, tag = 'scoped memory for lstm_cell_step.1']
    #allocation5 [shape = 'u8[4096]{0}', space=vmem, size = 0x1000, scoped, tag = 'input window, operand 2, single buffered']
    #allocation6 [shape = 's32[1]{0}', space=sflag, size = 0x4, scoped, tag = 'scoped memory for lstm_cell_step.1']
    #allocation7 [shape = 'u8[524288]{0}', space=vmem, size = 0x80000, scoped, tag = 'input window, operand 3, single buffered']
    #allocation8 [shape = 'u8[65536]{0}', space=vmem, size = 0x10000, scoped, tag = 'input window, operand 5, single buffered']
    #allocation9 [shape = 's32[1]{0}', space=sflag, size = 0x4, scoped, tag = 'scoped memory for lstm_cell_step.1']
    #allocation10 [shape = 'u8[4096]{0}', space=vmem, size = 0x1000, scoped, tag = 'output window, operand 0, single buffered']
    #allocation11 [shape = 'u8[4096]{0}', space=vmem, size = 0x1000, scoped, tag = 'output window, operand 1, single buffered']
    #allocation12 [shape = 's32[1]{0}', space=sflag, size = 0x4, scoped, tag = 'scoped memory for lstm_cell_step.1']
    #allocation13 [shape = 'u8[4096]{0}', space=vmem, size = 0x1000, scoped, tag = 'output window, operand 2, single buffered']
    %15 = vsyncpa [#allocation3], 0
    %16 = vsyncpa [#allocation6], 0
    %17 = vsyncpa [#allocation9], 0
    %18 = vsyncpa [#allocation4], 0
    %19 = vsyncpa [#allocation12], 0
    // Predicated region
    $region2: #{lstm_cell_step.1} parent=1 // pred_check
      _
    $region3: #{lstm_cell_step.1} parent=1 // pred_check_branch
      %21 = sbr.rel (0) target = $region5
    $region4: #{lstm_cell_step.1} parent=1 // pred_region
      %s23 = ssub.s32 128, 128
      %24 = vsyncadd [#allocation3], %s23
      %s26 = sshll.u32 [#allocation2], 4
      %s27 = int_to_ptr.vmem [resolvable:$true] %s26
      %29 = dma.hbm_to_vmem [thread:$0]  %s0, 128, %s27, [#allocation3]
    $region5: #{lstm_cell_step.1} parent=1 // pred_fallthru
      _
    // Predicated region
    $region6: #{lstm_cell_step.1} parent=1 // pred_check
      _
    $region7: #{lstm_cell_step.1} parent=1 // pred_check_branch
      %31 = sbr.rel (0) target = $region9
    $region8: #{lstm_cell_step.1} parent=1 // pred_region
      _
    $region9: #{lstm_cell_step.1} parent=1 // pred_fallthru
      _
    // Predicated region
    $region10: #{lstm_cell_step.1} parent=1 // pred_check
      _
    $region11: #{lstm_cell_step.1} parent=1 // pred_check_branch
      %33 = sbr.rel (0) target = $region13
    $region12: #{lstm_cell_step.1} parent=1 // pred_region
      %s35 = ssub.s32 128, 128
      %36 = vsyncadd [#allocation6], %s35
      %s38 = sshll.u32 [#allocation5], 4
      %s39 = int_to_ptr.vmem [resolvable:$true] %s38
      %41 = dma.hbm_to_vmem [thread:$0]  %s2, 128, %s39, [#allocation6]
    $region13: #{lstm_cell_step.1} parent=1 // pred_fallthru
      _
    // Predicated region
    $region14: #{lstm_cell_step.1} parent=1 // pred_check
      _
    $region15: #{lstm_cell_step.1} parent=1 // pred_check_branch
      %43 = sbr.rel (0) target = $region17
    $region16: #{lstm_cell_step.1} parent=1 // pred_region
      %s45 = ssub.s32 16384, 16384
      %46 = vsyncadd [#allocation6], %s45
      %s47 = sshll.u32 [#allocation7], 4
      %s48 = int_to_ptr.vmem [resolvable:$true] %s47
      %53 = dma.hbm_to_vmem [thread:$0]  %s3, 16384, %s48, [#allocation6], 512, 512, 32
    $region17: #{lstm_cell_step.1} parent=1 // pred_fallthru
      _
    // Predicated region
    $region18: #{lstm_cell_step.1} parent=1 // pred_check
      _
    $region19: #{lstm_cell_step.1} parent=1 // pred_check_branch
      %55 = sbr.rel (0) target = $region21
    $region20: #{lstm_cell_step.1} parent=1 // pred_region
      _
    $region21: #{lstm_cell_step.1} parent=1 // pred_fallthru
      _
    // Predicated region
    $region22: #{lstm_cell_step.1} parent=1 // pred_check
      _
    $region23: #{lstm_cell_step.1} parent=1 // pred_check_branch
      %57 = sbr.rel (0) target = $region25
    $region24: #{lstm_cell_step.1} parent=1 // pred_region
      %s59 = ssub.s32 2048, 2048
      %60 = vsyncadd [#allocation9], %s59
      %s61 = sshll.u32 [#allocation8], 4
      %s62 = int_to_ptr.vmem [resolvable:$true] %s61
      %67 = dma.hbm_to_vmem [thread:$0]  %s5, 2048, %s62, [#allocation9], 128, 128, 8
    $region25: #{lstm_cell_step.1} parent=1 // pred_fallthru
      _
    // Predicated region
    $region26: #{lstm_cell_step.1} parent=1 // pred_check
      _
    $region27: #{lstm_cell_step.1} parent=1 // pred_check_branch
      %69 = sbr.rel (0) target = $region29
    $region28: #{lstm_cell_step.1} parent=1 // pred_region
      _
    $region29: #{lstm_cell_step.1} parent=1 // pred_fallthru
      _
    // Predicated region
    $region30: #{lstm_cell_step.1} parent=1 // pred_check
      _
    $region31: #{lstm_cell_step.1} parent=1 // pred_check_branch
      %71 = sbr.rel (0) target = $region33
    $region32: #{lstm_cell_step.1} parent=1 // pred_region
      %72 = dma.done [#allocation3], 128
    $region33: #{lstm_cell_step.1} parent=1 // pred_fallthru
      _
    // Predicated region
    $region34: #{lstm_cell_step.1} parent=1 // pred_check
      _
    $region35: #{lstm_cell_step.1} parent=1 // pred_check_branch
      %74 = sbr.rel (0) target = $region37
    $region36: #{lstm_cell_step.1} parent=1 // pred_region
      %75 = dma.done [#allocation6], 128
    $region37: #{lstm_cell_step.1} parent=1 // pred_fallthru
      _
    // Predicated region
    $region38: #{lstm_cell_step.1} parent=1 // pred_check
      _
    $region39: #{lstm_cell_step.1} parent=1 // pred_check_branch
      %77 = sbr.rel (0) target = $region41
    $region40: #{lstm_cell_step.1} parent=1 // pred_region
      %78 = dma.done [#allocation6], 16384
    $region41: #{lstm_cell_step.1} parent=1 // pred_fallthru
      _
    // Predicated region
    $region42: #{lstm_cell_step.1} parent=1 // pred_check
      _
    $region43: #{lstm_cell_step.1} parent=1 // pred_check_branch
      %80 = sbr.rel (0) target = $region45
    $region44: #{lstm_cell_step.1} parent=1 // pred_region
      %81 = dma.done [#allocation9], 2048
    $region45: #{lstm_cell_step.1} parent=1 // pred_fallthru
      _
    %v82 = vld [vmem:[#allocation2] sm:$0xff]
    %v83 = vld [vmem:[%s1] sm:$0xff]
    %v84 = vld [vmem:[#allocation7] sm:$0xff]
    %v85 = vld [vmem:[#allocation7 + $0x8] sm:$0xff]
    %v86 = vld [vmem:[#allocation7 + $0x10] sm:$0xff]
    %v87 = vld [vmem:[#allocation7 + $0x18] sm:$0xff]
    %v88 = vld [vmem:[#allocation7 + $0x20] sm:$0xff]
    %v89 = vld [vmem:[#allocation7 + $0x28] sm:$0xff]
    %v90 = vld [vmem:[#allocation7 + $0x30] sm:$0xff]
    %v91 = vld [vmem:[#allocation7 + $0x38] sm:$0xff]
    %v92 = vld [vmem:[#allocation7 + $0x40] sm:$0xff]
    %v93 = vld [vmem:[#allocation7 + $0x48] sm:$0xff]
    %v94 = vld [vmem:[#allocation7 + $0x50] sm:$0xff]
    %v95 = vld [vmem:[#allocation7 + $0x58] sm:$0xff]
    %v96 = vld [vmem:[#allocation7 + $0x60] sm:$0xff]
    %v97 = vld [vmem:[#allocation7 + $0x68] sm:$0xff]
    %v98 = vld [vmem:[#allocation7 + $0x70] sm:$0xff]
    %v99 = vld [vmem:[#allocation7 + $0x78] sm:$0xff]
    %v100 = vld [vmem:[#allocation7 + $0x80] sm:$0xff]
    %v101 = vld [vmem:[#allocation7 + $0x88] sm:$0xff]
    %v102 = vld [vmem:[#allocation7 + $0x90] sm:$0xff]
    %v103 = vld [vmem:[#allocation7 + $0x98] sm:$0xff]
    %v104 = vld [vmem:[#allocation7 + $0xa0] sm:$0xff]
    %v105 = vld [vmem:[#allocation7 + $0xa8] sm:$0xff]
    %v106 = vld [vmem:[#allocation7 + $0xb0] sm:$0xff]
    %v107 = vld [vmem:[#allocation7 + $0xb8] sm:$0xff]
    %v108 = vld [vmem:[#allocation7 + $0xc0] sm:$0xff]
    %v109 = vld [vmem:[#allocation7 + $0xc8] sm:$0xff]
    %v110 = vld [vmem:[#allocation7 + $0xd0] sm:$0xff]
    %v111 = vld [vmem:[#allocation7 + $0xd8] sm:$0xff]
    %v112 = vld [vmem:[#allocation7 + $0xe0] sm:$0xff]
    %v113 = vld [vmem:[#allocation7 + $0xe8] sm:$0xff]
    %v114 = vld [vmem:[#allocation7 + $0xf0] sm:$0xff]
    %v115 = vld [vmem:[#allocation7 + $0xf8] sm:$0xff]
    %v116 = vld [vmem:[#allocation7 + $0x100] sm:$0xff]
    %v117 = vld [vmem:[#allocation7 + $0x108] sm:$0xff]
    %v118 = vld [vmem:[#allocation7 + $0x110] sm:$0xff]
    %v119 = vld [vmem:[#allocation7 + $0x118] sm:$0xff]
    %v120 = vld [vmem:[#allocation7 + $0x120] sm:$0xff]
    %v121 = vld [vmem:[#allocation7 + $0x128] sm:$0xff]
    %v122 = vld [vmem:[#allocation7 + $0x130] sm:$0xff]
    %v123 = vld [vmem:[#allocation7 + $0x138] sm:$0xff]
    %v124 = vld [vmem:[#allocation7 + $0x140] sm:$0xff]
    %v125 = vld [vmem:[#allocation7 + $0x148] sm:$0xff]
    %v126 = vld [vmem:[#allocation7 + $0x150] sm:$0xff]
    %v127 = vld [vmem:[#allocation7 + $0x158] sm:$0xff]
    %v128 = vld [vmem:[#allocation7 + $0x160] sm:$0xff]
    %v129 = vld [vmem:[#allocation7 + $0x168] sm:$0xff]
    %v130 = vld [vmem:[#allocation7 + $0x170] sm:$0xff]
    %v131 = vld [vmem:[#allocation7 + $0x178] sm:$0xff]
    %v132 = vld [vmem:[#allocation7 + $0x180] sm:$0xff]
    %v133 = vld [vmem:[#allocation7 + $0x188] sm:$0xff]
    %v134 = vld [vmem:[#allocation7 + $0x190] sm:$0xff]
    %v135 = vld [vmem:[#allocation7 + $0x198] sm:$0xff]
    %v136 = vld [vmem:[#allocation7 + $0x1a0] sm:$0xff]
    %v137 = vld [vmem:[#allocation7 + $0x1a8] sm:$0xff]
    %v138 = vld [vmem:[#allocation7 + $0x1b0] sm:$0xff]
    %v139 = vld [vmem:[#allocation7 + $0x1b8] sm:$0xff]
    %v140 = vld [vmem:[#allocation7 + $0x1c0] sm:$0xff]
    %v141 = vld [vmem:[#allocation7 + $0x1c8] sm:$0xff]
    %v142 = vld [vmem:[#allocation7 + $0x1d0] sm:$0xff]
    %v143 = vld [vmem:[#allocation7 + $0x1d8] sm:$0xff]
    %v144 = vld [vmem:[#allocation7 + $0x1e0] sm:$0xff]
    %v145 = vld [vmem:[#allocation7 + $0x1e8] sm:$0xff]
    %v146 = vld [vmem:[#allocation7 + $0x1f0] sm:$0xff]
    %v147 = vld [vmem:[#allocation7 + $0x1f8] sm:$0xff]
    %v148 = vld [vmem:[#allocation7 + $0x200] sm:$0xff]
    %v149 = vld [vmem:[#allocation7 + $0x208] sm:$0xff]
    %v150 = vld [vmem:[#allocation7 + $0x210] sm:$0xff]
    %v151 = vld [vmem:[#allocation7 + $0x218] sm:$0xff]
    %v152 = vld [vmem:[#allocation7 + $0x220] sm:$0xff]
    %v153 = vld [vmem:[#allocation7 + $0x228] sm:$0xff]
    %v154 = vld [vmem:[#allocation7 + $0x230] sm:$0xff]
    %v155 = vld [vmem:[#allocation7 + $0x238] sm:$0xff]
    %v156 = vld [vmem:[#allocation7 + $0x240] sm:$0xff]
    %v157 = vld [vmem:[#allocation7 + $0x248] sm:$0xff]
    %v158 = vld [vmem:[#allocation7 + $0x250] sm:$0xff]
    %v159 = vld [vmem:[#allocation7 + $0x258] sm:$0xff]
    %v160 = vld [vmem:[#allocation7 + $0x260] sm:$0xff]
    %v161 = vld [vmem:[#allocation7 + $0x268] sm:$0xff]
    %v162 = vld [vmem:[#allocation7 + $0x270] sm:$0xff]
    %v163 = vld [vmem:[#allocation7 + $0x278] sm:$0xff]
    %v164 = vld [vmem:[#allocation7 + $0x280] sm:$0xff]
    %v165 = vld [vmem:[#allocation7 + $0x288] sm:$0xff]
    %v166 = vld [vmem:[#allocation7 + $0x290] sm:$0xff]
    %v167 = vld [vmem:[#allocation7 + $0x298] sm:$0xff]
    %v168 = vld [vmem:[#allocation7 + $0x2a0] sm:$0xff]
    %v169 = vld [vmem:[#allocation7 + $0x2a8] sm:$0xff]
    %v170 = vld [vmem:[#allocation7 + $0x2b0] sm:$0xff]
    %v171 = vld [vmem:[#allocation7 + $0x2b8] sm:$0xff]
    %v172 = vld [vmem:[#allocation7 + $0x2c0] sm:$0xff]
    %v173 = vld [vmem:[#allocation7 + $0x2c8] sm:$0xff]
    %v174 = vld [vmem:[#allocation7 + $0x2d0] sm:$0xff]
    %v175 = vld [vmem:[#allocation7 + $0x2d8] sm:$0xff]
    %v176 = vld [vmem:[#allocation7 + $0x2e0] sm:$0xff]
    %v177 = vld [vmem:[#allocation7 + $0x2e8] sm:$0xff]
    %v178 = vld [vmem:[#allocation7 + $0x2f0] sm:$0xff]
    %v179 = vld [vmem:[#allocation7 + $0x2f8] sm:$0xff]
    %v180 = vld [vmem:[#allocation7 + $0x300] sm:$0xff]
    %v181 = vld [vmem:[#allocation7 + $0x308] sm:$0xff]
    %v182 = vld [vmem:[#allocation7 + $0x310] sm:$0xff]
    %v183 = vld [vmem:[#allocation7 + $0x318] sm:$0xff]
    %v184 = vld [vmem:[#allocation7 + $0x320] sm:$0xff]
    %v185 = vld [vmem:[#allocation7 + $0x328] sm:$0xff]
    %v186 = vld [vmem:[#allocation7 + $0x330] sm:$0xff]
    %v187 = vld [vmem:[#allocation7 + $0x338] sm:$0xff]
    %v188 = vld [vmem:[#allocation7 + $0x340] sm:$0xff]
    %v189 = vld [vmem:[#allocation7 + $0x348] sm:$0xff]
    %v190 = vld [vmem:[#allocation7 + $0x350] sm:$0xff]
    %v191 = vld [vmem:[#allocation7 + $0x358] sm:$0xff]
    %v192 = vld [vmem:[#allocation7 + $0x360] sm:$0xff]
    %v193 = vld [vmem:[#allocation7 + $0x368] sm:$0xff]
    %v194 = vld [vmem:[#allocation7 + $0x370] sm:$0xff]
    %v195 = vld [vmem:[#allocation7 + $0x378] sm:$0xff]
    %v196 = vld [vmem:[#allocation7 + $0x380] sm:$0xff]
    %v197 = vld [vmem:[#allocation7 + $0x388] sm:$0xff]
    %v198 = vld [vmem:[#allocation7 + $0x390] sm:$0xff]
    %v199 = vld [vmem:[#allocation7 + $0x398] sm:$0xff]
    %v200 = vld [vmem:[#allocation7 + $0x3a0] sm:$0xff]
    %v201 = vld [vmem:[#allocation7 + $0x3a8] sm:$0xff]
    %v202 = vld [vmem:[#allocation7 + $0x3b0] sm:$0xff]
    %v203 = vld [vmem:[#allocation7 + $0x3b8] sm:$0xff]
    %v204 = vld [vmem:[#allocation7 + $0x3c0] sm:$0xff]
    %v205 = vld [vmem:[#allocation7 + $0x3c8] sm:$0xff]
    %v206 = vld [vmem:[#allocation7 + $0x3d0] sm:$0xff]
    %v207 = vld [vmem:[#allocation7 + $0x3d8] sm:$0xff]
    %v208 = vld [vmem:[#allocation7 + $0x3e0] sm:$0xff]
    %v209 = vld [vmem:[#allocation7 + $0x3e8] sm:$0xff]
    %v210 = vld [vmem:[#allocation7 + $0x3f0] sm:$0xff]
    %v211 = vld [vmem:[#allocation7 + $0x3f8] sm:$0xff]
    %v212 = vld [vmem:[%s4] sm:$0xf]
    %v214 = vlaneseq
    %v215 = vshrl.u32 %v214, 7
    %v216 = vsub.s32 0, %v215
    %v217 = vrot.slane %v212, %v216
    %v218 = vlaneseq
    %v219 = vshrl.u32 %v218, 7
    %v220 = vsub.s32 1, %v219
    %v221 = vrot.slane %v212, %v220
    %v222 = vlaneseq
    %v223 = vshrl.u32 %v222, 7
    %v224 = vsub.s32 2, %v223
    %v225 = vrot.slane %v212, %v224
    %v226 = vlaneseq
    %v227 = vshrl.u32 %v226, 7
    %v228 = vsub.s32 3, %v227
    %v229 = vrot.slane %v212, %v228
    %234 = vmatprep.subr.mxu0 %v145
    %235 = vmatpush1.msra.mxu0 %v144
    %236 = vmatprep.subr.mxu0 %v141
    %237 = vmatpush1.msra.mxu0 %v140
    %238 = vmatprep.subr.mxu0 %v137
    %239 = vmatpush1.msra.mxu0 %v136
    %240 = vmatprep.subr.mxu0 %v133
    %241 = vmatpush1.msra.mxu0 %v132
    %242 = vmatprep.subr.mxu0 %v129
    %243 = vmatpush1.msra.mxu0 %v128
    %244 = vmatprep.subr.mxu0 %v125
    %245 = vmatpush1.msra.mxu0 %v124
    %246 = vmatprep.subr.mxu0 %v121
    %247 = vmatpush1.msra.mxu0 %v120
    %248 = vmatprep.subr.mxu0 %v117
    %249 = vmatpush1.msra.mxu0 %v116
    %250 = vmatprep.subr.mxu0 %v113
    %251 = vmatpush1.msra.mxu0 %v112
    %252 = vmatprep.subr.mxu0 %v109
    %253 = vmatpush1.msra.mxu0 %v108
    %254 = vmatprep.subr.mxu0 %v105
    %255 = vmatpush1.msra.mxu0 %v104
    %256 = vmatprep.subr.mxu0 %v101
    %257 = vmatpush1.msra.mxu0 %v100
    %258 = vmatprep.subr.mxu0 %v97
    %259 = vmatpush1.msra.mxu0 %v96
    %260 = vmatprep.subr.mxu0 %v93
    %261 = vmatpush1.msra.mxu0 %v92
    %262 = vmatprep.subr.mxu0 %v89
    %263 = vmatpush1.msra.mxu0 %v88
    %264 = vmatprep.subr.mxu0 %v85
    %265 = vmatpush1.msra.mxu0 %v84
    %266 = vmatprep.subr.mxu0 %v209
    %267 = vmatpush2.msra.mxu0 %v208
    %268 = vmatprep.subr.mxu0 %v205
    %269 = vmatpush2.msra.mxu0 %v204
    %270 = vmatprep.subr.mxu0 %v201
    %271 = vmatpush2.msra.mxu0 %v200
    %272 = vmatprep.subr.mxu0 %v197
    %273 = vmatpush2.msra.mxu0 %v196
    %274 = vmatprep.subr.mxu0 %v193
    %275 = vmatpush2.msra.mxu0 %v192
    %276 = vmatprep.subr.mxu0 %v189
    %277 = vmatpush2.msra.mxu0 %v188
    %278 = vmatprep.subr.mxu0 %v185
    %279 = vmatpush2.msra.mxu0 %v184
    %280 = vmatprep.subr.mxu0 %v181
    %281 = vmatpush2.msra.mxu0 %v180
    %282 = vmatprep.subr.mxu0 %v177
    %283 = vmatpush2.msra.mxu0 %v176
    %284 = vmatprep.subr.mxu0 %v173
    %285 = vmatpush2.msra.mxu0 %v172
    %286 = vmatprep.subr.mxu0 %v169
    %287 = vmatpush2.msra.mxu0 %v168
    %288 = vmatprep.subr.mxu0 %v165
    %289 = vmatpush2.msra.mxu0 %v164
    %290 = vmatprep.subr.mxu0 %v161
    %291 = vmatpush2.msra.mxu0 %v160
    %292 = vmatprep.subr.mxu0 %v157
    %293 = vmatpush2.msra.mxu0 %v156
    %294 = vmatprep.subr.mxu0 %v153
    %295 = vmatpush2.msra.mxu0 %v152
    %296 = vmatprep.subr.mxu0 %v149
    %297 = vmatpush2.msra.mxu0 %v148
    %298 = vmatprep.mubr.f32.mxu0 %v83
    %299 = vmatmul.mubr.f32.gmra.mxu0 %v82
    %v300 = vpop.f32.mrf.mxu0
    %v301 = vadd.f32 %v217, %v300
    %v302 = vpop.f32.mrf.mxu0
    %v303 = vadd.f32 %v221, %v302
    %304 = vdwg.mxu0
    %305 = vmatprep.subr.mxu0 %v147
    %306 = vmatpush1.msra.mxu0 %v146
    %307 = vmatprep.subr.mxu0 %v143
    %308 = vmatpush1.msra.mxu0 %v142
    %309 = vmatprep.subr.mxu0 %v139
    %310 = vmatpush1.msra.mxu0 %v138
    %311 = vmatprep.subr.mxu0 %v135
    %312 = vmatpush1.msra.mxu0 %v134
    %313 = vmatprep.subr.mxu0 %v131
    %314 = vmatpush1.msra.mxu0 %v130
    %315 = vmatprep.subr.mxu0 %v127
    %316 = vmatpush1.msra.mxu0 %v126
    %317 = vmatprep.subr.mxu0 %v123
    %318 = vmatpush1.msra.mxu0 %v122
    %319 = vmatprep.subr.mxu0 %v119
    %320 = vmatpush1.msra.mxu0 %v118
    %321 = vmatprep.subr.mxu0 %v115
    %322 = vmatpush1.msra.mxu0 %v114
    %323 = vmatprep.subr.mxu0 %v111
    %324 = vmatpush1.msra.mxu0 %v110
    %325 = vmatprep.subr.mxu0 %v107
    %326 = vmatpush1.msra.mxu0 %v106
    %327 = vmatprep.subr.mxu0 %v103
    %328 = vmatpush1.msra.mxu0 %v102
    %329 = vmatprep.subr.mxu0 %v99
    %330 = vmatpush1.msra.mxu0 %v98
    %331 = vmatprep.subr.mxu0 %v95
    %332 = vmatpush1.msra.mxu0 %v94
    %333 = vmatprep.subr.mxu0 %v91
    %334 = vmatpush1.msra.mxu0 %v90
    %335 = vmatprep.subr.mxu0 %v87
    %336 = vmatpush1.msra.mxu0 %v86
    %337 = vmatprep.subr.mxu0 %v211
    %338 = vmatpush2.msra.mxu0 %v210
    %339 = vmatprep.subr.mxu0 %v207
    %340 = vmatpush2.msra.mxu0 %v206
    %341 = vmatprep.subr.mxu0 %v203
    %342 = vmatpush2.msra.mxu0 %v202
    %343 = vmatprep.subr.mxu0 %v199
    %344 = vmatpush2.msra.mxu0 %v198
    %345 = vmatprep.subr.mxu0 %v195
    %346 = vmatpush2.msra.mxu0 %v194
    %347 = vmatprep.subr.mxu0 %v191
    %348 = vmatpush2.msra.mxu0 %v190
    %349 = vmatprep.subr.mxu0 %v187
    %350 = vmatpush2.msra.mxu0 %v186
    %351 = vmatprep.subr.mxu0 %v183
    %352 = vmatpush2.msra.mxu0 %v182
    %353 = vmatprep.subr.mxu0 %v179
    %354 = vmatpush2.msra.mxu0 %v178
    %355 = vmatprep.subr.mxu0 %v175
    %356 = vmatpush2.msra.mxu0 %v174
    %357 = vmatprep.subr.mxu0 %v171
    %358 = vmatpush2.msra.mxu0 %v170
    %359 = vmatprep.subr.mxu0 %v167
    %360 = vmatpush2.msra.mxu0 %v166
    %361 = vmatprep.subr.mxu0 %v163
    %362 = vmatpush2.msra.mxu0 %v162
    %363 = vmatprep.subr.mxu0 %v159
    %364 = vmatpush2.msra.mxu0 %v158
    %365 = vmatprep.subr.mxu0 %v155
    %366 = vmatpush2.msra.mxu0 %v154
    %367 = vmatprep.subr.mxu0 %v151
    %368 = vmatpush2.msra.mxu0 %v150
    %369 = vmatprep.mubr.f32.mxu0 %v83
    %370 = vmatmul.mubr.f32.gmra.mxu0 %v82
    %v371 = vpop.f32.mrf.mxu0
    %v372 = vadd.f32 %v225, %v371
    %v373 = vpop.f32.mrf.mxu0
    %v374 = vadd.f32 %v229, %v373
    %375 = vdwg.mxu0
    %v376 = vxor.u32 %v301, 2147483648
    %v377 = vxor.u32 %v303, 2147483648
    %v378 = vxor.u32 %v372, 2147483648
    %v379 = vxor.u32 %v374, 2147483648
    %v380 = vmul.f32 %v376, 1.442695
    %v381 = vpow.pop %v380
    %v382 = vmul.f32 %v377, 1.442695
    %v383 = vpow.pop %v382
    %v384 = vmul.f32 %v378, 1.442695
    %v385 = vpow.pop %v384
    %v386 = vmul.f32 %v379, 1.442695
    %v387 = vpow.pop %v386
    %v388 = vadd.f32 %v381, 1.0
    %v389 = vadd.f32 %v383, 1.0
    %v390 = vadd.f32 %v385, 1.0
    %v391 = vadd.f32 %v387, 1.0
    %v392 = vrcp.pop %v388
    %v393 = vmul.f32 1.0, %v392
    %v394 = vrcp.pop %v389
    %v395 = vmul.f32 1.0, %v394
    %v396 = vrcp.pop %v390
    %v397 = vmul.f32 1.0, %v396
    %v398 = vrcp.pop %v391
    %v399 = vmul.f32 1.0, %v398
    %v400 = vld [vmem:[#allocation5] sm:$0xff]
    %v401 = vmul.f32 %v400, %v393
    %v402 = vmul.f32 %v395, %v397
    %v403 = vadd.f32 %v401, %v402
    %v404 = vtanh.pop %v403
    %v405 = vmul.f32 %v399, %v404
    %v406 = vlaneseq
    %v407 = vand.u32 %v406, 127
    %vm408 = vcmp.lt.s32.totalorder %v407, 32
    %v409 = vsel %vm408, 1, 0
    %vm410 = vcmp.eq.s32.totalorder %v409, 1
    %v411 = vsel %vm410, %v403, 0.0
    %v412 = vsel %vm410, %v405, 0.0
    %v413 = vld [vmem:[#allocation8] sm:$0xff]
    %v414 = vld [vmem:[#allocation8 + $0x8] sm:$0xff]
    %v415 = vld [vmem:[#allocation8 + $0x10] sm:$0xff]
    %v416 = vld [vmem:[#allocation8 + $0x18] sm:$0xff]
    %v417 = vld [vmem:[#allocation8 + $0x20] sm:$0xff]
    %v418 = vld [vmem:[#allocation8 + $0x28] sm:$0xff]
    %v419 = vld [vmem:[#allocation8 + $0x30] sm:$0xff]
    %v420 = vld [vmem:[#allocation8 + $0x38] sm:$0xff]
    %v421 = vld [vmem:[#allocation8 + $0x40] sm:$0xff]
    %v422 = vld [vmem:[#allocation8 + $0x48] sm:$0xff]
    %v423 = vld [vmem:[#allocation8 + $0x50] sm:$0xff]
    %v424 = vld [vmem:[#allocation8 + $0x58] sm:$0xff]
    %v425 = vld [vmem:[#allocation8 + $0x60] sm:$0xff]
    %v426 = vld [vmem:[#allocation8 + $0x68] sm:$0xff]
    %v427 = vld [vmem:[#allocation8 + $0x70] sm:$0xff]
    %v428 = vld [vmem:[#allocation8 + $0x78] sm:$0xff]
    %v429 = vld [vmem:[%s6] sm:$0x1]
    %v431 = vlaneseq
    %v432 = vshrl.u32 %v431, 7
    %v433 = vsub.s32 0, %v432
    %v434 = vrot.slane %v429, %v433
    %436 = vmatprep.subr.mxu0 0.0
    %437 = vmatpush1.msra.mxu0 %v428
    %438 = vmatprep.subr.mxu0 0.0
    %439 = vmatpush1.msra.mxu0 %v427
    %440 = vmatprep.subr.mxu0 0.0
    %441 = vmatpush1.msra.mxu0 %v426
    %442 = vmatprep.subr.mxu0 0.0
    %443 = vmatpush1.msra.mxu0 %v425
    %444 = vmatprep.subr.mxu0 0.0
    %445 = vmatpush1.msra.mxu0 %v424
    %446 = vmatprep.subr.mxu0 0.0
    %447 = vmatpush1.msra.mxu0 %v423
    %448 = vmatprep.subr.mxu0 0.0
    %449 = vmatpush1.msra.mxu0 %v422
    %450 = vmatprep.subr.mxu0 0.0
    %451 = vmatpush1.msra.mxu0 %v421
    %452 = vmatprep.subr.mxu0 0.0
    %453 = vmatpush1.msra.mxu0 %v420
    %454 = vmatprep.subr.mxu0 0.0
    %455 = vmatpush1.msra.mxu0 %v419
    %456 = vmatprep.subr.mxu0 0.0
    %457 = vmatpush1.msra.mxu0 %v418
    %458 = vmatprep.subr.mxu0 0.0
    %459 = vmatpush1.msra.mxu0 %v417
    %460 = vmatprep.subr.mxu0 0.0
    %461 = vmatpush1.msra.mxu0 %v416
    %462 = vmatprep.subr.mxu0 0.0
    %463 = vmatpush1.msra.mxu0 %v415
    %464 = vmatprep.subr.mxu0 0.0
    %465 = vmatpush1.msra.mxu0 %v414
    %466 = vmatprep.subr.mxu0 0.0
    %467 = vmatpush1.msra.mxu0 %v413
    %468 = vmatprep.subr.mxu0 0.0
    %469 = vmatpush2.msra.mxu0 0.0
    %470 = vmatprep.subr.mxu0 0.0
    %471 = vmatpush2.msra.mxu0 0.0
    %472 = vmatprep.subr.mxu0 0.0
    %473 = vmatpush2.msra.mxu0 0.0
    %474 = vmatprep.subr.mxu0 0.0
    %475 = vmatpush2.msra.mxu0 0.0
    %476 = vmatprep.subr.mxu0 0.0
    %477 = vmatpush2.msra.mxu0 0.0
    %478 = vmatprep.subr.mxu0 0.0
    %479 = vmatpush2.msra.mxu0 0.0
    %480 = vmatprep.subr.mxu0 0.0
    %481 = vmatpush2.msra.mxu0 0.0
    %482 = vmatprep.subr.mxu0 0.0
    %483 = vmatpush2.msra.mxu0 0.0
    %484 = vmatprep.subr.mxu0 0.0
    %485 = vmatpush2.msra.mxu0 0.0
    %486 = vmatprep.subr.mxu0 0.0
    %487 = vmatpush2.msra.mxu0 0.0
    %488 = vmatprep.subr.mxu0 0.0
    %489 = vmatpush2.msra.mxu0 0.0
    %490 = vmatprep.subr.mxu0 0.0
    %491 = vmatpush2.msra.mxu0 0.0
    %492 = vmatprep.subr.mxu0 0.0
    %493 = vmatpush2.msra.mxu0 0.0
    %494 = vmatprep.subr.mxu0 0.0
    %495 = vmatpush2.msra.mxu0 0.0
    %496 = vmatprep.subr.mxu0 0.0
    %497 = vmatpush2.msra.mxu0 0.0
    %498 = vmatprep.subr.mxu0 0.0
    %499 = vmatpush2.msra.mxu0 0.0
    %500 = vmatprep.mubr.f32.mxu0 0.0
    %501 = vmatmul.mubr.f32.gmra.mxu0 %v412
    %v502 = vpop.f32.mrf.mxu0
    %v503 = vadd.f32 %v434, %v502
    %v504 = vpop.f32.mrf.mxu0
    %505 = vdwg.mxu0
    %v506 = vmax.f32 %v503, 0.0
    %507 = vst [vmem:[#allocation10] sm:$0xff] %v506
    %508 = vst [vmem:[#allocation11] sm:$0xff] %v412
    %509 = vst [vmem:[#allocation13] sm:$0xff] %v411
    // Predicated region
    $region46: #{lstm_cell_step.1} parent=1 // pred_check
      _
    $region47: #{lstm_cell_step.1} parent=1 // pred_check_branch
      %511 = sbr.rel (0) target = $region49
    $region48: #{lstm_cell_step.1} parent=1 // pred_region
      %s513 = ssub.s32 128, 128
      %514 = vsyncadd [#allocation4], %s513
      %s516 = sshll.u32 [#allocation10], 4
      %s517 = int_to_ptr.vmem [resolvable:$true] %s516
      %519 = dma.vmem_to_hbm [thread:$0]  %s517, 128, %s7, [#allocation4]
    $region49: #{lstm_cell_step.1} parent=1 // pred_fallthru
      _
    // Predicated region
    $region50: #{lstm_cell_step.1} parent=1 // pred_check
      _
    $region51: #{lstm_cell_step.1} parent=1 // pred_check_branch
      %521 = sbr.rel (0) target = $region53
    $region52: #{lstm_cell_step.1} parent=1 // pred_region
      %s523 = ssub.s32 128, 128
      %524 = vsyncadd [#allocation12], %s523
      %s526 = sshll.u32 [#allocation11], 4
      %s527 = int_to_ptr.vmem [resolvable:$true] %s526
      %529 = dma.vmem_to_hbm [thread:$0]  %s527, 128, %s8, [#allocation12]
    $region53: #{lstm_cell_step.1} parent=1 // pred_fallthru
      _
    // Predicated region
    $region54: #{lstm_cell_step.1} parent=1 // pred_check
      _
    $region55: #{lstm_cell_step.1} parent=1 // pred_check_branch
      %531 = sbr.rel (0) target = $region57
    $region56: #{lstm_cell_step.1} parent=1 // pred_region
      %s533 = ssub.s32 128, 128
      %534 = vsyncadd [#allocation12], %s533
      %s536 = sshll.u32 [#allocation13], 4
      %s537 = int_to_ptr.vmem [resolvable:$true] %s536
      %539 = dma.vmem_to_hbm [thread:$0]  %s537, 128, %s9, [#allocation12]
    $region57: #{lstm_cell_step.1} parent=1 // pred_fallthru
      _
    // Predicated region
    $region58: #{lstm_cell_step.1} parent=1 // pred_check
      _
    $region59: #{lstm_cell_step.1} parent=1 // pred_check_branch
      %541 = sbr.rel (0) target = $region61
    $region60: #{lstm_cell_step.1} parent=1 // pred_region
      %542 = dma.done [#allocation4], 128
    $region61: #{lstm_cell_step.1} parent=1 // pred_fallthru
      _
    // Predicated region
    $region62: #{lstm_cell_step.1} parent=1 // pred_check
      _
    $region63: #{lstm_cell_step.1} parent=1 // pred_check_branch
      %544 = sbr.rel (0) target = $region65
    $region64: #{lstm_cell_step.1} parent=1 // pred_region
      %545 = dma.done [#allocation12], 128
    $region65: #{lstm_cell_step.1} parent=1 // pred_fallthru
      _
    // Predicated region
    $region66: #{lstm_cell_step.1} parent=1 // pred_check
      _
    $region67: #{lstm_cell_step.1} parent=1 // pred_check_branch
      %547 = sbr.rel (0) target = $region69
    $region68: #{lstm_cell_step.1} parent=1 // pred_region
      %548 = dma.done [#allocation12], 128
    $region69: #{lstm_cell_step.1} parent=1 // pred_fallthru
      _
    %549 = vsyncpa [#allocation3], 1
    %550 = vsyncpa [#allocation6], 1
    %551 = vsyncpa [#allocation9], 1
    %552 = vsyncpa [#allocation4], 1
    %553 = vsyncpa [#allocation12], 1

</llo_original>
